<compile_context>
chip_gen: v6e
topology: v6e:2x2x1
jax: 0.10.0
libtpu: 0.0.40
codegen_flags: <defaults>
</compile_context>

<pallas_src>
import math

import jax
import jax.numpy as jnp
from jax.experimental import pallas as pl
from jax.experimental.pallas import tpu as pltpu


# ----------------------------------------------------------------------------
# Static config (baked into the kernel as compile-time constants)
# ----------------------------------------------------------------------------
MIN_LOG_STD = -5.0
MAX_LOG_STD = 2.0
LOG_STD_INIT = 0.0


def _round_up(n: int, m: int) -> int:
    return ((n + m - 1) // m) * m


def _compute_bm(B: int, block_rows: int) -> int:
    # Row tile: multiple of 16 (bf16 packs 16 rows per sublane group), capped
    # by block_rows, and sized so large batches produce >= 2 grid steps (keeps
    # both v7x TensorCores busy via the "parallel" semantics; negligible extra
    # step overhead on 1-TC v5e/v6e).
    half = _round_up(pl.cdiv(B, 2), 16)
    bm = min(_round_up(block_rows, 16), max(half, 16))
    return max(bm, 16)


# ----------------------------------------------------------------------------
# Pallas kernel: fused linear (single bf16 MXU matmul) + tanh / clamp+exp
# epilogue, two outputs (mu, std) from the same grid step.
# ----------------------------------------------------------------------------
def gaussian_net_kernel(x_ref, w_ref, b_ref, mu_ref, std_ref):
    # bf16 x bf16 -> f32 accumulation on the MXU.
    y = jnp.dot(x_ref[...], w_ref[...], preferred_element_type=jnp.float32)
    y = y + b_ref[...]  # bias is f32

    a = mu_ref.shape[-1]  # static at trace time
    # Epilogue stays in f32 (v5e has no bf16 VPU/EUP; outputs are f32).
    mu_ref[...] = jnp.tanh(y[:, :a]).astype(mu_ref.dtype)
    std_ref[...] = jnp.exp(
        jnp.clip(y[:, a:], MIN_LOG_STD, MAX_LOG_STD)).astype(std_ref.dtype)


def gaussian_net_forward(x, w_fused, b_fused, *, block_rows: int = 1024):
    """Fused GaussianNet forward.

    x:       (B, D)  activations (bf16 preferred; f32 is cast to bf16)
    w_fused: (D, 2A) fused weight in kernel layout (= torch W.T), bf16
    b_fused: (1, 2A) fused bias, f32
    returns: (mu, std), each (B, A) float32
    """
    B, D = x.shape
    two_a = w_fused.shape[1]
    A = two_a // 2

    # Feed the MXU in bf16: in a fused policy net the producer should already
    # emit bf16 activations so this cast is a no-op at the call site.
    if x.dtype != jnp.bfloat16:
        x = x.astype(jnp.bfloat16)

    bm = _compute_bm(B, block_rows)
    grid = (pl.cdiv(B, bm),)

    # Explicit VMEM budget from the tile sizes (x + outputs double-buffered,
    # weights/bias resident), 2x headroom, capped at 48 MiB (< v7x's 64 MiB
    # physical VMEM so Mosaic internal scratch always fits).
    bytes_est = (2 * bm * D * 2                       # bf16 x tiles (double-buffered)
                 + 2 * 2 * bm * A * 4                 # mu + std tiles (double-buffered)
                 + 2 * (D * two_a * 2 + two_a * 4))   # bf16 weights + f32 bias
    vmem_limit = int(min(48 * 2**20, max(4 * 2**20, 2 * bytes_est)))

    mu, std = pl.pallas_call(
        gaussian_net_kernel,
        out_shape=(jax.ShapeDtypeStruct((B, A), jnp.float32),
                   jax.ShapeDtypeStruct((B, A), jnp.float32)),
        grid=grid,
        in_specs=[
            pl.BlockSpec((bm, D), lambda i: (i, 0)),       # x: tiled over rows
            pl.BlockSpec((D, two_a), lambda i: (0, 0)),    # weight: VMEM-resident
            pl.BlockSpec((1, two_a), lambda i: (0, 0)),    # bias: VMEM-resident
        ],
        out_specs=[
            pl.BlockSpec((bm, A), lambda i: (i, 0)),       # mu
            pl.BlockSpec((bm, A), lambda i: (i, 0)),       # std
        ],
        compiler_params=pltpu.CompilerParams(
            dimension_semantics=("parallel",),
            vmem_limit_bytes=vmem_limit,
        ),
    )(x, w_fused, b_fused)

    return mu, std


# ----------------------------------------------------------------------------
# CustomNormal equivalent (thin JAX glue over the kernel outputs)
# ----------------------------------------------------------------------------
class CustomNormalJax:
    def __init__(self, mu, std):
        self.mu = mu
        self.std = std

    def sample(self, key):
        return self.mu + self.std * jax.random.normal(key, self.mu.shape)

    def log_probs(self, actions):
        var = self.std ** 2
        lp = (-((actions - self.mu) ** 2) / (2 * var)
              - jnp.log(self.std) - 0.5 * math.log(2 * math.pi))
        return jnp.sum(lp, axis=-1, keepdims=True)

    def entropy(self):
        ent = 0.5 + 0.5 * math.log(2 * math.pi) + jnp.log(self.std)
        return jnp.sum(ent, axis=-1, keepdims=True)


# ----------------------------------------------------------------------------
# Deterministic parameter init (mirrors torch orthogonal_(gain=0.01) + zeros),
# done ONCE and stored directly in the fused (D, 2A) bf16 kernel layout.
# ----------------------------------------------------------------------------
def orthogonal_init(key, shape, gain):
    rows, cols = shape
    a = jax.random.normal(key, (rows, cols), dtype=jnp.float32)
    flattened = a if rows >= cols else a.T
    q, r = jnp.linalg.qr(flattened)
    q = q * jnp.sign(jnp.diag(r))
    if rows < cols:
        q = q.T
    return gain * q


def make_params(key, num_inputs, num_outputs):
    """Returns (w_fused (D, 2A) bf16, b_fused (1, 2A) f32) in kernel layout."""
    num_linear_outputs = 2 * num_outputs  # use_std_param = False
    # torch layout (2A, D), orthogonal with gain 0.01
    w_torch = orthogonal_init(key, (num_linear_outputs, num_inputs), gain=0.01)
    bias = jnp.zeros((num_linear_outputs,), jnp.float32)
    bias = bias.at[num_outputs:].set(LOG_STD_INIT)
    # One-time layout/dtype work: transpose to (D, 2A) and store bf16 so the
    # MXU sees a matched bf16 x bf16 pair (no silent f32 promotion).
    w_fused = jnp.asarray(w_torch.T, dtype=jnp.bfloat16)
    b_fused = bias.reshape(1, num_linear_outputs)
    return w_fused, b_fused


def _reference(x, w_fused, b_fused, A):
    # Same numerics as the kernel: bf16 operands, f32 accumulation/epilogue.
    x_bf = x.astype(jnp.bfloat16).astype(jnp.float32)
    w_f = w_fused.astype(jnp.float32)
    y = x_bf @ w_f + b_fused
    mu = jnp.tanh(y[:, :A])
    std = jnp.exp(jnp.clip(y[:, A:], MIN_LOG_STD, MAX_LOG_STD))
    return mu, std


# ----------------------------------------------------------------------------
if __name__ == "__main__":
    # TODO(synk): in a full policy, this epilogue would ideally be fused into
    # the upstream policy-net pallas_call (and the producer would emit bf16
    # activations directly); kept standalone here per the spec.
    key = jax.random.PRNGKey(0)
    k_x, k_w, k_x2 = jax.random.split(key, 3)

    # Small per-step rollout shapes: batch=16, num_inputs=32, num_outputs=8.
    B, D, A = 16, 32, 8
    x = jax.random.normal(k_x, (B, D), dtype=jnp.float32)
    w_fused, b_fused = make_params(k_w, D, A)

    mu, std = gaussian_net_forward(x, w_fused, b_fused)
    jax.block_until_ready((mu, std))

    mu_ref, std_ref = _reference(x, w_fused, b_fused, A)
    assert jnp.allclose(mu, mu_ref, atol=1e-3), "mu mismatch"
    assert jnp.allclose(std, std_ref, atol=1e-3), "std mismatch"

    # Exercise the tiled (grid > 1) path as well, as used for the PPO-update
    # regime (small block_rows so the grid actually has >1 step).
    B2 = 64
    x2 = jax.random.normal(k_x2, (B2, D), dtype=jnp.float32)
    mu2, std2 = gaussian_net_forward(x2, w_fused, b_fused, block_rows=16)
    jax.block_until_ready((mu2, std2))
    mu2_ref, std2_ref = _reference(x2, w_fused, b_fused, A)
    assert jnp.allclose(mu2, mu2_ref, atol=1e-3), "mu2 mismatch"
    assert jnp.allclose(std2, std2_ref, atol=1e-3), "std2 mismatch"

    # Exercise the distribution glue once (not part of the kernel hot path).
    dist = CustomNormalJax(mu, std)
    _ = jax.block_until_ready(dist.entropy())
    _ = jax.block_until_ready(dist.log_probs(dist.sample(jax.random.PRNGKey(1))))

    print("KERNEL_OK")
</pallas_src>

<mosaic_0001>
module attributes {stable_mosaic.version = 11 : i64} {
  func.func @gaussian_net_kernel(%arg0: i32, %arg1: memref<16x32xbf16, #tpu.memory_space<vmem>>, %arg2: memref<32x16xbf16, #tpu.memory_space<vmem>>, %arg3: memref<1x16xf32, #tpu.memory_space<vmem>>, %arg4: memref<16x8xf32, #tpu.memory_space<vmem>>, %arg5: memref<16x8xf32, #tpu.memory_space<vmem>>) attributes {dimension_semantics = [#tpu.dimension_semantics<parallel>], iteration_bounds = array<i64: 1>, scalar_prefetch = 0 : i64, scratch_operands = 0 : i64, tpu.core_type = #tpu.core_type<tc>, window_params = [{transform_indices = @transform_0, window_bounds = array<i64: 16, 32>}, {pipeline_mode = #tpu.pipeline_mode<synchronous>, transform_indices = @transform_1, window_bounds = array<i64: 32, 16>}, {pipeline_mode = #tpu.pipeline_mode<synchronous>, transform_indices = @transform_2, window_bounds = array<i64: 1, 16>}, {transform_indices = @transform_3, window_bounds = array<i64: 16, 8>}, {transform_indices = @transform_4, window_bounds = array<i64: 16, 8>}]} {
    %c0 = arith.constant 0 : index
    %c0_0 = arith.constant 0 : index
    %0 = vector.load %arg1[%c0, %c0_0] : memref<16x32xbf16, #tpu.memory_space<vmem>>, vector<16x32xbf16>
    %c0_1 = arith.constant 0 : index
    %c0_2 = arith.constant 0 : index
    %1 = vector.load %arg2[%c0_1, %c0_2] : memref<32x16xbf16, #tpu.memory_space<vmem>>, vector<32x16xbf16>
    %cst = arith.constant dense<0.000000e+00> : vector<16x16xf32>
    %2 = tpu.matmul %0, %1, %cst {dimension_numbers = #tpu.dot_dimension_numbers<[1], [0], [0], [1], [0, 0, 1, 1], [], []>} : vector<16x32xbf16>, vector<32x16xbf16>, vector<16x16xf32> -> vector<16x16xf32>
    %c0_3 = arith.constant 0 : index
    %c0_4 = arith.constant 0 : index
    %3 = vector.load %arg3[%c0_3, %c0_4] : memref<1x16xf32, #tpu.memory_space<vmem>>, vector<1x16xf32>
    %4 = vector.broadcast %3 : vector<1x16xf32> to vector<16x16xf32>
    %5 = arith.addf %2, %4 : vector<16x16xf32>
    %6 = vector.extract_strided_slice %5 {offsets = [0, 0], sizes = [16, 8], strides = [1, 1]} : vector<16x16xf32> to vector<16x8xf32>
    %7 = math.tanh %6 : vector<16x8xf32>
    %c0_5 = arith.constant 0 : index
    %c0_6 = arith.constant 0 : index
    %8 = vector.load %arg4[%c0_5, %c0_6] : memref<16x8xf32, #tpu.memory_space<vmem>>, vector<16x8xf32>
    tpu.vector_store %arg4[%c0_5, %c0_6], %7 {strides = array<i32>} : memref<16x8xf32, #tpu.memory_space<vmem>>, vector<16x8xf32>,
    %9 = vector.extract_strided_slice %5 {offsets = [0, 8], sizes = [16, 8], strides = [1, 1]} : vector<16x16xf32> to vector<16x8xf32>
    %cst_7 = arith.constant -5.000000e+00 : f32
    %cst_8 = arith.constant 2.000000e+00 : f32
    %10 = vector.broadcast %cst_7 : f32 to vector<16x8xf32>
    %11 = arith.maximumf %10, %9 : vector<16x8xf32>
    %12 = vector.broadcast %cst_8 : f32 to vector<16x8xf32>
    %13 = arith.minimumf %12, %11 : vector<16x8xf32>
    %14 = math.exp %13 : vector<16x8xf32>
    %c0_9 = arith.constant 0 : index
    %c0_10 = arith.constant 0 : index
    %15 = vector.load %arg5[%c0_9, %c0_10] : memref<16x8xf32, #tpu.memory_space<vmem>>, vector<16x8xf32>
    tpu.vector_store %arg5[%c0_9, %c0_10], %14 {strides = array<i32>} : memref<16x8xf32, #tpu.memory_space<vmem>>, vector<16x8xf32>,
    return
  }
  func.func @transform_0(%arg0: i32) -> (i32, i32) {
    %c0_i32 = arith.constant 0 : i32
    %c0_i32_0 = arith.constant 0 : i32
    return %arg0, %c0_i32 : i32, i32
  }
  func.func @transform_1(%arg0: i32) -> (i32, i32) {
    %c0_i32 = arith.constant 0 : i32
    %c0_i32_0 = arith.constant 0 : i32
    %c0_i32_1 = arith.constant 0 : i32
    return %c0_i32, %c0_i32_0 : i32, i32
  }
  func.func @transform_2(%arg0: i32) -> (i32, i32) {
    %c0_i32 = arith.constant 0 : i32
    %c0_i32_0 = arith.constant 0 : i32
    %c0_i32_1 = arith.constant 0 : i32
    return %c0_i32, %c0_i32_0 : i32, i32
  }
  func.func @transform_3(%arg0: i32) -> (i32, i32) {
    %c0_i32 = arith.constant 0 : i32
    %c0_i32_0 = arith.constant 0 : i32
    return %arg0, %c0_i32 : i32, i32
  }
  func.func @transform_4(%arg0: i32) -> (i32, i32) {
    %c0_i32 = arith.constant 0 : i32
    %c0_i32_0 = arith.constant 0 : i32
    return %arg0, %c0_i32 : i32, i32
  }
}

</mosaic_0001>

<llo_original>
// kernel: tpu_custom_call.1
$region0: #{tpu_custom_call.1}
  #allocation0 [shape = 'u32[]', space=smem, size = 0x4, offset = 0x4, fixed_abs, tag = 'smem constant byte address 0x4 - core index']
  #allocation1 [shape = 'u32[144,128]{1,0:T(1,128)}', space=vmem, size = 0x12000, scoped, tag = 'internal scratch']
  %s0 = inlined_call_operand.vmem [shape: bf16[16,32], index: 0, kind: input, shape index: {}]
  %s1 = inlined_call_operand.vmem [shape: bf16[32,16], index: 1, kind: input, shape index: {}]
  %s2 = inlined_call_operand.vmem [shape: f32[1,16], index: 2, kind: input, shape index: {}]
  %s3 = inlined_call_operand.vmem [shape: f32[16,8], index: 3, kind: output, shape index: {0}]
  %s4 = inlined_call_operand.vmem [shape: f32[16,8], index: 4, kind: output, shape index: {1}]
  %5 = xla_tuple %s3, %s4
  %s6 = sld [smem:[#allocation0]]
  $region30: #{tpu_custom_call.1} parent=0
    _
  %s8 = ssub.s32 1, %s6
  %s9 = scalar_select 0, %s8, %s6
  // Predicated region
  $region2: #{tpu_custom_call.1} parent=0 // pred_check
    _
  $region3: #{tpu_custom_call.1} parent=0 // pred_check_branch
    %11 = sbr.rel (0) target = $region5
  $region4: #{tpu_custom_call.1} parent=0 // pred_region
    _
  $region5: #{tpu_custom_call.1} parent=0 // pred_fallthru
    _
  // Predicated region
  $region6: #{tpu_custom_call.1} parent=0 // pred_check
    _
  $region7: #{tpu_custom_call.1} parent=0 // pred_check_branch
    %13 = sbr.rel (0) target = $region9
  $region8: #{tpu_custom_call.1} parent=0 // pred_region
    _
  $region9: #{tpu_custom_call.1} parent=0 // pred_fallthru
    _
  // Predicated region
  $region10: #{tpu_custom_call.1} parent=0 // pred_check
    _
  $region11: #{tpu_custom_call.1} parent=0 // pred_check_branch
    %15 = sbr.rel (0) target = $region13
  $region12: #{tpu_custom_call.1} parent=0 // pred_region
    _
  $region13: #{tpu_custom_call.1} parent=0 // pred_fallthru
    _
  %v17 = vld [vmem:[%s0] sm:$0xf]
  %v18 = vld [vmem:[%s0 + $0x4] sm:$0xf]
  %v19 = vld [vmem:[%s1] sm:$0xf]
  %v20 = vld [vmem:[%s1 + $0x4] sm:$0xf]
  %v21 = vld [vmem:[%s1 + $0x8] sm:$0xf]
  %v22 = vld [vmem:[%s1 + $0xc] sm:$0xf]
  %v23 = vld [vmem:[%s2] sm:$0x1]
  %v25 = vlaneseq
  %v26 = vshrl.u32 %v25, 7
  %v27 = vsub.s32 0, %v26
  %v28 = vrot.slane %v23, %v27
  %v32 = vunpack.c.l.b16 %v17
  %v33 = vunpack.c.l.b16 %v18
  %v34 = vpack.c.b16 %v33, %v32
  %v39 = vunpack.c.l.b16 %v19
  %v40 = vunpack.c.l.b16 %v20
  %v41 = vunpack.c.l.b16 %v21
  %v42 = vunpack.c.l.b16 %v22
  %v43 = vpack.c.b16 %v40, %v39
  %v44 = vpack.c.b16 %v42, %v41
  %vm47 = vcmask 261120
  %v49 = vsel %vm47, %v34, 0
  %51 = vmatprep.subr.bf16.mxu0 0
  %52 = vmatpush1.bf16.msra.mxu0 0
  %53 = vmatprep.subr.bf16.mxu0 0
  %54 = vmatpush1.bf16.msra.mxu0 0
  %55 = vmatprep.subr.bf16.mxu0 0
  %56 = vmatpush1.bf16.msra.mxu0 0
  %57 = vmatprep.subr.bf16.mxu0 0
  %58 = vmatpush1.bf16.msra.mxu0 0
  %59 = vmatprep.subr.bf16.mxu0 0
  %60 = vmatpush1.bf16.msra.mxu0 0
  %61 = vmatprep.subr.bf16.mxu0 0
  %62 = vmatpush1.bf16.msra.mxu0 0
  %63 = vmatprep.subr.bf16.mxu0 0
  %64 = vmatpush1.bf16.msra.mxu0 %v44
  %65 = vmatprep.subr.bf16.mxu0 0
  %66 = vmatpush1.bf16.msra.mxu0 %v43
  %67 = vmatprep.subr.bf16.mxu0 0
  %68 = vmatpush2.bf16.msra.mxu0 0
  %69 = vmatprep.subr.bf16.mxu0 0
  %70 = vmatpush2.bf16.msra.mxu0 0
  %71 = vmatprep.subr.bf16.mxu0 0
  %72 = vmatpush2.bf16.msra.mxu0 0
  %73 = vmatprep.subr.bf16.mxu0 0
  %74 = vmatpush2.bf16.msra.mxu0 0
  %75 = vmatprep.subr.bf16.mxu0 0
  %76 = vmatpush2.bf16.msra.mxu0 0
  %77 = vmatprep.subr.bf16.mxu0 0
  %78 = vmatpush2.bf16.msra.mxu0 0
  %79 = vmatprep.subr.bf16.mxu0 0
  %80 = vmatpush2.bf16.msra.mxu0 0
  %81 = vmatprep.subr.bf16.mxu0 0
  %82 = vmatpush2.bf16.msra.mxu0 0
  %83 = vmatprep.mubr.bf16.mxu0 0
  %84 = vmatmul.mubr.bf16.gmra.mxu0 %v49
  %v85 = vpop.f32.mrf.mxu0
  %v86 = vadd.f32 %v28, %v85
  %v87 = vpop.f32.mrf.mxu0
  %v88 = vpop.f32.mrf.mxu0
  %v89 = vadd.f32 %v28, %v88
  %v90 = vpop.f32.mrf.mxu0
  %91 = vdwg.mxu0
  %v92 = vtanh.pop %v86
  %v93 = vtanh.pop %v89
  %vm94 = vcmask 64512
  %95 = vst.msk [vmem:[%s3] sm:$0xff] %vm94, %v92
  %96 = vst.msk [vmem:[%s3 + $0x8] sm:$0xff] %vm94, %v93
  %v97 = vmax.f32 %v86, -5.0
  %v98 = vmax.f32 %v89, -5.0
  %v99 = vmin.f32 %v97, 2.0
  %v100 = vmin.f32 %v98, 2.0
  %v101 = vmul.f32 %v99, 1.442695
  %v102 = vpow.pop %v101
  %v103 = vmul.f32 %v100, 1.442695
  %v104 = vpow.pop %v103
  %107 = vrot.lane.b32.xlu0 %v102, 120
  %v108 = vpop.permute.xlu0 %107
  %109 = vrot.lane.b32.xlu0 %v104, 120
  %v110 = vpop.permute.xlu0 %109
  %113 = vst.msk [vmem:[%s4] sm:$0xff] %vm94, %v108
  %114 = vst.msk [vmem:[%s4 + $0x8] sm:$0xff] %vm94, %v110
  // Predicated region
  $region14: #{tpu_custom_call.1} parent=0 // pred_check
    _
  $region15: #{tpu_custom_call.1} parent=0 // pred_check_branch
    %116 = sbr.rel (0) target = $region17
  $region16: #{tpu_custom_call.1} parent=0 // pred_region
    _
  $region17: #{tpu_custom_call.1} parent=0 // pred_fallthru
    _
  // Predicated region
  $region18: #{tpu_custom_call.1} parent=0 // pred_check
    _
  $region19: #{tpu_custom_call.1} parent=0 // pred_check_branch
    %118 = sbr.rel (0) target = $region21
  $region20: #{tpu_custom_call.1} parent=0 // pred_region
    _
  $region21: #{tpu_custom_call.1} parent=0 // pred_fallthru
    _
  // Predicated region
  $region22: #{tpu_custom_call.1} parent=0 // pred_check
    _
  $region23: #{tpu_custom_call.1} parent=0 // pred_check_branch
    %120 = sbr.rel (0) target = $region25
  $region24: #{tpu_custom_call.1} parent=0 // pred_region
    _
  $region25: #{tpu_custom_call.1} parent=0 // pred_fallthru
    _
  // Predicated region
  $region26: #{tpu_custom_call.1} parent=0 // pred_check
    _
  $region27: #{tpu_custom_call.1} parent=0 // pred_check_branch
    %122 = sbr.rel (0) target = $region29
  $region28: #{tpu_custom_call.1} parent=0 // pred_region
    _
  $region29: #{tpu_custom_call.1} parent=0 // pred_fallthru
    _

</llo_original>
